<compile_context>
chip_gen: v6e
topology: v6e:2x2x1
jax: 0.10.0
libtpu: 0.0.40
codegen_flags: <defaults>
</compile_context>

<pallas_src>
import numpy as np
import jax
import jax.numpy as jnp
from jax.experimental import pallas as pl
from jax.experimental.pallas import tpu as pltpu

# ---- small, module-consistent hyper-parameters ----
B   = 2          # batch
H   = 32         # num_hiddens
L   = 8          # z_length (length of the encoder feature map)
E   = 8          # num_embeddings
DM  = 16         # embedding_dim
DM2 = DM // 2    # embedding_dim // 2
Z   = 4          # z_dim
MID = E * DM2    # middle_len
KSZ = 4          # conv kernel size
BN_EPS = 1e-5

KIN      = H * L        # 256  flattened encoder-feature length
OUT_W    = 128          # lane-dense output / constants-slab width
DEC_LANE = 64           # decoder output occupies lanes 64..127 of the output slab
KL_LANE  = 8            # KL scalar lane (a guaranteed-zero lane of the affine output)
PACK_W   = KIN + Z      # 260: packed input = [flattened zin | eps]

# rows of the packed constants slab (shape (N_CONST_ROWS, 128) f32, K-major)
ROW_WCMB = 0            # rows 0..255 : combined weight (256, 128):
                        #               lanes 0..3 mu, 4..7 logvar, 64..127 det-decoder
ROW_BCMB = KIN          # row 256     : combined bias (128,)
ROW_WDEC = KIN + 1      # rows 257..260 : decoder weight rows (Z, 128), lanes 64..127
ROW_KLH  = KIN + 1 + Z  # row 261     : one-hot selecting the KL output lane
N_CONST_ROWS = 264      # padded to a multiple of 8 sublanes


# ----------------------------------------------------------------------------------
# Pallas kernel: 1 MXU matmul + 4 VPU MACs + reparameterize/KL, all resident in VMEM.
# ----------------------------------------------------------------------------------
def vae_kernel(consts_ref, x_ref, out_ref):
    f32 = jnp.float32
    zin = x_ref[:, 0:KIN]                                     # (B, 256)
    eps = x_ref[:, KIN:KIN + Z]                               # (B, Z)  (vreg-aligned slice)

    # One MXU matmul: mu (lanes 0..3), logvar (lanes 4..7) and the full deterministic
    # decoder output (lanes 64..127).  Weights are K-major -> no transpose.
    w_comb = consts_ref[ROW_WCMB:ROW_WCMB + KIN, :]           # (256, 128)
    ml = jnp.dot(zin, w_comb, preferred_element_type=f32)     # (B, 128)
    ml = ml + consts_ref[ROW_BCMB:ROW_BCMB + 1, :]

    mu = ml[:, 0:Z]                                           # raw mu (used for KL)
    logvar = ml[:, Z:2 * Z]
    std = jnp.exp(logvar)                                     # source convention: std = exp(logvar)
    es = eps * std                                            # (B, Z) stochastic coefficients

    # Stochastic decoder term: K = Z = 4 -> 4 VPU broadcast-MACs (no second MXU dot).
    dec = ml
    for j in range(Z):
        dec = dec + es[:, j:j + 1] * consts_ref[ROW_WDEC + j:ROW_WDEC + j + 1, :]

    # KL from raw mu / logvar; std reused instead of a second exp.
    kl_term = 0.5 * (mu * mu + std * std - 1.0) - logvar      # (B, Z)
    kl = jnp.sum(jnp.sum(kl_term, axis=1, keepdims=True),
                 axis=0, keepdims=True)                       # (1, 1)

    # Single lane-dense store: KL in lane 8, decoder-input in lanes 64..127.
    out_ref[...] = dec + kl * consts_ref[ROW_KLH:ROW_KLH + 1, :]


@jax.jit
def vae_model_forward(zin, eps, consts):
    # Pack the flattened encoder features and eps into ONE input slab -> 2 input DMAs.
    packed = jnp.concatenate([zin.reshape(B, KIN), eps], axis=1)        # (B, 260)
    slab = pl.pallas_call(
        vae_kernel,
        out_shape=jax.ShapeDtypeStruct((B, OUT_W), jnp.float32),
        in_specs=[pl.BlockSpec(memory_space=pltpu.MemorySpace.VMEM)] * 2,
        out_specs=pl.BlockSpec(memory_space=pltpu.MemorySpace.VMEM),
    )(consts, packed)
    out = slab[:, DEC_LANE:DEC_LANE + E * L].reshape(B, E, L)   # after_vq_fc output
    kl = slab[0, KL_LANE]                                       # KL scalar
    return out, kl


# ----------------------------------------------------------------------------------
# Host-side constant folding (done once at setup; free at runtime).
# ----------------------------------------------------------------------------------
def build_select_matrices():
    """S[k]: gather matrix for Conv1d(k=4,s=2,p=1); T[k]: scatter for ConvTranspose1d."""
    S = np.zeros((KSZ, DM, DM2), np.float64)
    T = np.zeros((KSZ, DM2, DM), np.float64)
    for k in range(KSZ):
        for t in range(DM2):                 # conv: out[t] += W[k] * x[2t + k - 1]
            idx = 2 * t + k - 1
            if 0 <= idx < DM:
                S[k, idx, t] = 1.0
        for j in range(DM2):                 # convT: out[2j + k - 1] += W[k] * x[j]
            t_out = 2 * j + k - 1
            if 0 <= t_out < DM:
                T[k, j, t_out] = 1.0
    return S, T


def fold_constants(wpv, bpv, wfc1, bfc1, wc, bc, bn1, wl1, bl1, bnz,
                   wl2, bl2, wct, bct, bn2, wfc2, bfc2):
    """Fold the fully-linear encoder / decoder chains (plus BN(mu) and the
    deterministic part of the decoder) into one combined affine map and pack every
    constant the kernel needs into one lane-dense, K-major (264, 128) f32 slab."""
    f64 = lambda a: np.asarray(a, np.float64)
    (wpv, bpv, wfc1, bfc1, wc, bc, wl1, bl1, wl2, bl2, wct, bct, wfc2, bfc2) = map(
        f64, (wpv, bpv, wfc1, bfc1, wc, bc, wl1, bl1, wl2, bl2, wct, bct, wfc2, bfc2))
    bn1, bnz, bn2 = f64(bn1), f64(bnz), f64(bn2)
    S, T = build_select_matrices()

    def bn_scale_shift(bn):
        g, b, rm, rv = bn
        a = g / np.sqrt(rv + BN_EPS)
        return a, b - rm * a

    I_L, I_E = np.eye(L), np.eye(E)

    # -------- encoder side: zin(H,L) -> mu/logvar, all affine --------
    A1 = np.einsum('eh,lm->hlem', wpv, I_L).reshape(H * L, E * L)       # pre_vq_conv (k=1)
    c1 = np.repeat(bpv[:, None], L, axis=1).reshape(E * L)
    A2 = np.einsum('ef,eld->elfd', I_E, wfc1).reshape(E * L, E * DM)    # pre_vq_fc (per-channel)
    c2 = bfc1.reshape(E * DM)
    A3 = np.einsum('kfe,kdt->edft', wc, S).reshape(E * DM, E * DM2)     # Conv1d(k4,s2,p1)
    c3 = np.repeat(bc[:, None], DM2, axis=1).reshape(E * DM2)
    a1, d1 = bn_scale_shift(bn1)                                        # BatchNorm1d(E)
    sc1 = np.repeat(a1[:, None], DM2, axis=1).reshape(E * DM2)
    sh1 = np.repeat(d1[:, None], DM2, axis=1).reshape(E * DM2)
    A3, c3 = A3 * sc1[None, :], c3 * sc1 + sh1
    A5 = wl1.reshape(2 * Z, E * DM2).T                                  # Linear(MID, 2Z)
    c5 = bl1
    A_enc = A1 @ A2 @ A3 @ A5                                           # (256, 2Z)
    b_enc = ((c1 @ A2 + c2) @ A3 + c3) @ A5 + c5                        # (2Z,)

    # -------- BatchNorm1d(z_dim) applied to mu inside reparameterize --------
    a_z, b_z = bn_scale_shift(bnz)

    # -------- decoder side: zq(Z) -> after_vq_fc output, all affine --------
    Ad1 = wl2.reshape(Z, E * DM2)                                       # Linear(Z, MID)
    cd1 = bl2.reshape(E * DM2)
    Ad3 = np.einsum('kef,kjt->ejft', wct, T).reshape(E * DM2, E * DM)   # ConvTranspose1d
    cd3 = np.repeat(bct[:, None], DM, axis=1).reshape(E * DM)
    a2, d2 = bn_scale_shift(bn2)                                        # BatchNorm1d(E)
    sc2 = np.repeat(a2[:, None], DM, axis=1).reshape(E * DM)
    sh2 = np.repeat(d2[:, None], DM, axis=1).reshape(E * DM)
    Ad3, cd3 = Ad3 * sc2[None, :], cd3 * sc2 + sh2
    Ad5 = np.einsum('ef,edl->edfl', I_E, wfc2).reshape(E * DM, E * L)   # after_vq_fc
    cd5 = bfc2.reshape(E * L)
    A_dec = Ad1 @ Ad3 @ Ad5                                             # (Z, 64)
    b_dec = (cd1 @ Ad3 + cd3) @ Ad5 + cd5                               # (64,)

    # -------- fold BN(mu) + deterministic decoder into the encoder matmul --------
    A_mu, A_lv = A_enc[:, :Z], A_enc[:, Z:]
    b_mu, b_lv = b_enc[:Z], b_enc[Z:]
    M_det = A_mu @ (a_z[:, None] * A_dec)                               # (256, 64)
    b_det = (b_mu * a_z + b_z) @ A_dec + b_dec                          # (64,)

    # -------- pack into ONE lane-dense, K-major slab --------
    slab = np.zeros((N_CONST_ROWS, OUT_W), np.float32)
    slab[ROW_WCMB:ROW_WCMB + KIN, 0:Z] = A_mu
    slab[ROW_WCMB:ROW_WCMB + KIN, Z:2 * Z] = A_lv
    slab[ROW_WCMB:ROW_WCMB + KIN, DEC_LANE:] = M_det
    slab[ROW_BCMB, 0:Z] = b_mu
    slab[ROW_BCMB, Z:2 * Z] = b_lv
    slab[ROW_BCMB, DEC_LANE:] = b_det
    slab[ROW_WDEC:ROW_WDEC + Z, DEC_LANE:] = A_dec
    slab[ROW_KLH, KL_LANE] = 1.0
    return jnp.asarray(slab)


# ----------------------------------------------------------------------------------
# Pure-JAX unfolded reference (mirrors the PyTorch ops) for a correctness check.
# ----------------------------------------------------------------------------------
def reference_forward(zin, eps, wpv, bpv, wfc1, bfc1, wc, bc, bn1, wl1, bl1,
                      bnz, wl2, bl2, wct, bct, bn2, wfc2, bfc2):
    Smat, Tmat = build_select_matrices()
    Smat = jnp.asarray(Smat, jnp.float32)
    Tmat = jnp.asarray(Tmat, jnp.float32)

    z = jnp.einsum('bhl,eh->bel', zin, wpv) + bpv[None, :, None]          # pre_vq_conv
    z = jnp.einsum('bel,eld->bed', z, wfc1) + bfc1[None]                  # pre_vq_fc
    h = jnp.zeros((B, E, DM2), jnp.float32) + bc[None, :, None]           # Conv1d(k4,s2,p1)
    for k in range(KSZ):
        xs = jnp.einsum('bed,dt->bet', z, Smat[k])
        h = h + jnp.einsum('bet,fe->bft', xs, wc[k])
    g1, b1, rm1, rv1 = bn1
    h = (h - rm1[None, :, None]) * jax.lax.rsqrt(rv1 + BN_EPS)[None, :, None] \
        * g1[None, :, None] + b1[None, :, None]
    ml = jnp.einsum('bft,oft->bo', h, wl1) + bl1[None]                    # Linear(MID, 2Z)
    mu, logvar = ml[:, :Z], ml[:, Z:]
    gz, bz, rmz, rvz = bnz
    mu_bn = (mu - rmz[None]) * jax.lax.rsqrt(rvz + BN_EPS)[None] * gz[None] + bz[None]
    std = jnp.exp(logvar)
    zq = mu_bn + eps * std
    d = jnp.einsum('bz,zej->bej', zq, wl2) + bl2[None]                    # Linear(Z, MID)
    ct = jnp.zeros((B, E, DM), jnp.float32) + bct[None, :, None]          # ConvTranspose1d
    for k in range(KSZ):
        tmp = jnp.einsum('bej,ef->bfj', d, wct[k])
        ct = ct + jnp.einsum('bfj,jt->bft', tmp, Tmat[k])
    g2, b2, rm2, rv2 = bn2
    ct = (ct - rm2[None, :, None]) * jax.lax.rsqrt(rv2 + BN_EPS)[None, :, None] \
        * g2[None, :, None] + b2[None, :, None]
    out = jnp.einsum('bfd,fdl->bfl', ct, wfc2) + bfc2[None]               # after_vq_fc
    kl = jnp.sum(0.5 * (mu ** 2 + jnp.exp(logvar) ** 2 - 1.0) - logvar)
    return out, kl


def bn_params(key, c):
    """Deterministic (gamma, beta, running_mean, running_var) stacked as (4, c)."""
    k1, k2, k3, k4 = jax.random.split(key, 4)
    g = 1.0 + 0.1 * jax.random.normal(k1, (c,))
    b = 0.1 * jax.random.normal(k2, (c,))
    rm = 0.1 * jax.random.normal(k3, (c,))
    rv = 0.9 + 0.2 * jax.random.uniform(k4, (c,))
    return jnp.stack([g, b, rm, rv]).astype(jnp.float32)


if __name__ == "__main__":
    key = jax.random.PRNGKey(0)
    ks = jax.random.split(key, 20)
    rnd = lambda k, shape, s=0.1: (s * jax.random.normal(k, shape)).astype(jnp.float32)

    # encoder-feature input (Encoder body not provided) and reparameterization noise
    zin = jax.random.normal(ks[0], (B, H, L), jnp.float32)
    eps = jax.random.normal(ks[1], (B, Z), jnp.float32)

    # raw per-layer parameters (same conventions as before)
    wpv = rnd(ks[2], (E, H));            bpv = rnd(ks[3], (E,))            # pre_vq_conv
    wfc1 = rnd(ks[4], (E, L, DM));       bfc1 = rnd(ks[5], (E, DM))        # pre_vq_fc
    wc = rnd(ks[6], (KSZ, E, E));        bc = rnd(ks[7], (E,))             # encode Conv1d
    bn1 = bn_params(ks[8], E)
    wl1 = rnd(ks[9], (2 * Z, E, DM2));   bl1 = rnd(ks[10], (2 * Z,))       # encode Linear
    bnz = bn_params(ks[11], Z)                                             # VAE.bn
    wl2 = rnd(ks[12], (Z, E, DM2));      bl2 = rnd(ks[13], (E, DM2))       # decode Linear
    wct = rnd(ks[14], (KSZ, E, E));      bct = rnd(ks[15], (E,))           # ConvTranspose1d
    bn2 = bn_params(ks[16], E)
    wfc2 = rnd(ks[17], (E, DM, L));      bfc2 = rnd(ks[18], (E, L))        # after_vq_fc

    params = (wpv, bpv, wfc1, bfc1, wc, bc, bn1, wl1, bl1, bnz,
              wl2, bl2, wct, bct, bn2, wfc2, bfc2)

    # one-time host-side fold + pack; kept device-resident and reused across calls
    consts = jax.device_put(fold_constants(*params))

    out, kl = jax.block_until_ready(vae_model_forward(zin, eps, consts))
    assert out.shape == (B, E, L) and kl.shape == ()

    # correctness check against the unfolded pure-JAX reference
    ref_out, ref_kl = reference_forward(zin, eps, *params)
    np.testing.assert_allclose(np.asarray(out), np.asarray(ref_out), rtol=2e-3, atol=2e-3)
    np.testing.assert_allclose(float(kl), float(ref_kl), rtol=2e-3, atol=2e-3)

    print("KERNEL_OK")
</pallas_src>

<mosaic_0001>
module attributes {stable_mosaic.version = 11 : i64} {
  func.func @vae_kernel(%arg0: memref<264x128xf32, #tpu.memory_space<vmem>>, %arg1: memref<2x260xf32, #tpu.memory_space<vmem>>, %arg2: memref<2x128xf32, #tpu.memory_space<vmem>>) attributes {dimension_semantics = [], scalar_prefetch = 0 : i64, scratch_operands = 0 : i64, tpu.core_type = #tpu.core_type<tc>} {
    %c0 = arith.constant 0 : index
    %c0_0 = arith.constant 0 : index
    %0 = vector.load %arg1[%c0, %c0_0] : memref<2x260xf32, #tpu.memory_space<vmem>>, vector<2x256xf32>
    %c0_1 = arith.constant 0 : index
    %c256 = arith.constant 256 : index
    %1 = vector.load %arg1[%c0_1, %c256] : memref<2x260xf32, #tpu.memory_space<vmem>>, vector<2x4xf32>
    %c0_2 = arith.constant 0 : index
    %c0_3 = arith.constant 0 : index
    %2 = vector.load %arg0[%c0_2, %c0_3] : memref<264x128xf32, #tpu.memory_space<vmem>>, vector<256x128xf32>
    %cst = arith.constant dense<0.000000e+00> : vector<2x128xf32>
    %3 = tpu.matmul %0, %2, %cst {dimension_numbers = #tpu.dot_dimension_numbers<[1], [0], [0], [1], [0, 0, 1, 1], [], []>} : vector<2x256xf32>, vector<256x128xf32>, vector<2x128xf32> -> vector<2x128xf32>
    %c256_4 = arith.constant 256 : index
    %c0_5 = arith.constant 0 : index
    %4 = vector.load %arg0[%c256_4, %c0_5] : memref<264x128xf32, #tpu.memory_space<vmem>>, vector<1x128xf32>
    %5 = vector.broadcast %4 : vector<1x128xf32> to vector<2x128xf32>
    %6 = arith.addf %3, %5 : vector<2x128xf32>
    %7 = vector.extract_strided_slice %6 {offsets = [0, 0], sizes = [2, 4], strides = [1, 1]} : vector<2x128xf32> to vector<2x4xf32>
    %8 = vector.extract_strided_slice %6 {offsets = [0, 4], sizes = [2, 4], strides = [1, 1]} : vector<2x128xf32> to vector<2x4xf32>
    %9 = math.exp %8 : vector<2x4xf32>
    %10 = arith.mulf %1, %9 : vector<2x4xf32>
    %11 = vector.extract_strided_slice %10 {offsets = [0, 0], sizes = [2, 1], strides = [1, 1]} : vector<2x4xf32> to vector<2x1xf32>
    %c257 = arith.constant 257 : index
    %c0_6 = arith.constant 0 : index
    %12 = vector.load %arg0[%c257, %c0_6] : memref<264x128xf32, #tpu.memory_space<vmem>>, vector<1x128xf32>
    %13 = vector.broadcast %11 : vector<2x1xf32> to vector<2x128xf32>
    %14 = vector.broadcast %12 : vector<1x128xf32> to vector<2x128xf32>
    %15 = arith.mulf %13, %14 : vector<2x128xf32>
    %16 = arith.addf %6, %15 : vector<2x128xf32>
    %17 = vector.extract_strided_slice %10 {offsets = [0, 1], sizes = [2, 1], strides = [1, 1]} : vector<2x4xf32> to vector<2x1xf32>
    %c258 = arith.constant 258 : index
    %c0_7 = arith.constant 0 : index
    %18 = vector.load %arg0[%c258, %c0_7] : memref<264x128xf32, #tpu.memory_space<vmem>>, vector<1x128xf32>
    %19 = vector.broadcast %17 : vector<2x1xf32> to vector<2x128xf32>
    %20 = vector.broadcast %18 : vector<1x128xf32> to vector<2x128xf32>
    %21 = arith.mulf %19, %20 : vector<2x128xf32>
    %22 = arith.addf %16, %21 : vector<2x128xf32>
    %23 = vector.extract_strided_slice %10 {offsets = [0, 2], sizes = [2, 1], strides = [1, 1]} : vector<2x4xf32> to vector<2x1xf32>
    %c259 = arith.constant 259 : index
    %c0_8 = arith.constant 0 : index
    %24 = vector.load %arg0[%c259, %c0_8] : memref<264x128xf32, #tpu.memory_space<vmem>>, vector<1x128xf32>
    %25 = vector.broadcast %23 : vector<2x1xf32> to vector<2x128xf32>
    %26 = vector.broadcast %24 : vector<1x128xf32> to vector<2x128xf32>
    %27 = arith.mulf %25, %26 : vector<2x128xf32>
    %28 = arith.addf %22, %27 : vector<2x128xf32>
    %29 = vector.extract_strided_slice %10 {offsets = [0, 3], sizes = [2, 1], strides = [1, 1]} : vector<2x4xf32> to vector<2x1xf32>
    %c260 = arith.constant 260 : index
    %c0_9 = arith.constant 0 : index
    %30 = vector.load %arg0[%c260, %c0_9] : memref<264x128xf32, #tpu.memory_space<vmem>>, vector<1x128xf32>
    %31 = vector.broadcast %29 : vector<2x1xf32> to vector<2x128xf32>
    %32 = vector.broadcast %30 : vector<1x128xf32> to vector<2x128xf32>
    %33 = arith.mulf %31, %32 : vector<2x128xf32>
    %34 = arith.addf %28, %33 : vector<2x128xf32>
    %35 = arith.mulf %7, %7 : vector<2x4xf32>
    %36 = arith.mulf %9, %9 : vector<2x4xf32>
    %37 = arith.addf %35, %36 : vector<2x4xf32>
    %cst_10 = arith.constant 1.000000e+00 : f32
    %38 = vector.broadcast %cst_10 : f32 to vector<2x4xf32>
    %39 = arith.subf %37, %38 : vector<2x4xf32>
    %cst_11 = arith.constant 5.000000e-01 : f32
    %40 = vector.broadcast %cst_11 : f32 to vector<2x4xf32>
    %41 = arith.mulf %40, %39 : vector<2x4xf32>
    %42 = arith.subf %41, %8 : vector<2x4xf32>
    %cst_12 = arith.constant dense<0.000000e+00> : vector<2xf32>
    %43 = vector.multi_reduction <add>, %42, %cst_12 [1] : vector<2x4xf32> to vector<2xf32>
    %44 = vector.shape_cast %43 : vector<2xf32> to vector<2x1xf32>
    %cst_13 = arith.constant dense<0.000000e+00> : vector<1xf32>
    %45 = vector.multi_reduction <add>, %44, %cst_13 [0] : vector<2x1xf32> to vector<1xf32>
    %46 = vector.shape_cast %45 : vector<1xf32> to vector<1x1xf32>
    %c261 = arith.constant 261 : index
    %c0_14 = arith.constant 0 : index
    %47 = vector.load %arg0[%c261, %c0_14] : memref<264x128xf32, #tpu.memory_space<vmem>>, vector<1x128xf32>
    %48 = vector.broadcast %46 : vector<1x1xf32> to vector<1x128xf32>
    %49 = arith.mulf %48, %47 : vector<1x128xf32>
    %50 = vector.broadcast %49 : vector<1x128xf32> to vector<2x128xf32>
    %51 = arith.addf %34, %50 : vector<2x128xf32>
    %c0_15 = arith.constant 0 : index
    %c0_16 = arith.constant 0 : index
    %52 = vector.load %arg2[%c0_15, %c0_16] : memref<2x128xf32, #tpu.memory_space<vmem>>, vector<2x128xf32>
    tpu.vector_store %arg2[%c0_15, %c0_16], %51 {strides = array<i32>} : memref<2x128xf32, #tpu.memory_space<vmem>>, vector<2x128xf32>,
    return
  }
}

</mosaic_0001>

<llo_original>
// kernel: vae_model_forward.1
$region0: #{vae_model_forward.1}
  #allocation0 [shape = 'u32[]', space=smem, size = 0x4, offset = 0x4, fixed_abs, tag = 'smem constant byte address 0x4 - core index']
  #allocation1 [shape = 'u32[144,128]{1,0:T(1,128)}', space=vmem, size = 0x12000, scoped, tag = 'internal scratch']
  %s0 = inlined_call_operand.hbm [shape: f32[264,128], index: 0, kind: input, shape index: {}]
  %s1 = inlined_call_operand.vmem [shape: f32[2,260], index: 1, kind: input, shape index: {}]
  %s2 = inlined_call_operand.vmem [shape: f32[2,128], index: 2, kind: output, shape index: {}]
  %s3 = sld [smem:[#allocation0]]
  $region22: #{vae_model_forward.1} parent=0
    _
  %s5 = ssub.s32 1, %s3
  %s6 = scalar_select 0, %s5, %s3
  $region1: #{vae_model_forward.1} parent=0
    #allocation2 [shape = 'u8[135168]{0}', space=vmem, size = 0x21000, scoped, tag = 'input window, operand 0, single buffered']
    #allocation3 [shape = 's32[1]{0}', space=sflag, size = 0x4, scoped, tag = 'scoped memory for vae_model_forward.1']
    %7 = vsyncpa [#allocation3], 0
    // Predicated region
    $region2: #{vae_model_forward.1} parent=1 // pred_check
      _
    $region3: #{vae_model_forward.1} parent=1 // pred_check_branch
      %9 = sbr.rel (0) target = $region5
    $region4: #{vae_model_forward.1} parent=1 // pred_region
      %s11 = ssub.s32 4224, 4224
      %12 = vsyncadd [#allocation3], %s11
      %s13 = sshll.u32 [#allocation2], 4
      %s14 = int_to_ptr.vmem [resolvable:$true] %s13
      %19 = dma.hbm_to_vmem [thread:$0]  %s0, 4224, %s14, [#allocation3], 128, 128, 8
    $region5: #{vae_model_forward.1} parent=1 // pred_fallthru
      _
    // Predicated region
    $region6: #{vae_model_forward.1} parent=1 // pred_check
      _
    $region7: #{vae_model_forward.1} parent=1 // pred_check_branch
      %21 = sbr.rel (0) target = $region9
    $region8: #{vae_model_forward.1} parent=1 // pred_region
      _
    $region9: #{vae_model_forward.1} parent=1 // pred_fallthru
      _
    // Predicated region
    $region10: #{vae_model_forward.1} parent=1 // pred_check
      _
    $region11: #{vae_model_forward.1} parent=1 // pred_check_branch
      %23 = sbr.rel (0) target = $region13
    $region12: #{vae_model_forward.1} parent=1 // pred_region
      %24 = dma.done [#allocation3], 4224
    $region13: #{vae_model_forward.1} parent=1 // pred_fallthru
      _
    %v25 = vld [vmem:[%s1] sm:$0xf]
    %v26 = vld [vmem:[%s1 + $0x4] sm:$0x3]
    %v27 = vld [vmem:[#allocation2] sm:$0xff]
    %v28 = vld [vmem:[#allocation2 + $0x8] sm:$0xff]
    %v29 = vld [vmem:[#allocation2 + $0x10] sm:$0xff]
    %v30 = vld [vmem:[#allocation2 + $0x18] sm:$0xff]
    %v31 = vld [vmem:[#allocation2 + $0x20] sm:$0xff]
    %v32 = vld [vmem:[#allocation2 + $0x28] sm:$0xff]
    %v33 = vld [vmem:[#allocation2 + $0x30] sm:$0xff]
    %v34 = vld [vmem:[#allocation2 + $0x38] sm:$0xff]
    %v35 = vld [vmem:[#allocation2 + $0x40] sm:$0xff]
    %v36 = vld [vmem:[#allocation2 + $0x48] sm:$0xff]
    %v37 = vld [vmem:[#allocation2 + $0x50] sm:$0xff]
    %v38 = vld [vmem:[#allocation2 + $0x58] sm:$0xff]
    %v39 = vld [vmem:[#allocation2 + $0x60] sm:$0xff]
    %v40 = vld [vmem:[#allocation2 + $0x68] sm:$0xff]
    %v41 = vld [vmem:[#allocation2 + $0x70] sm:$0xff]
    %v42 = vld [vmem:[#allocation2 + $0x78] sm:$0xff]
    %v43 = vld [vmem:[#allocation2 + $0x80] sm:$0xff]
    %v44 = vld [vmem:[#allocation2 + $0x88] sm:$0xff]
    %v45 = vld [vmem:[#allocation2 + $0x90] sm:$0xff]
    %v46 = vld [vmem:[#allocation2 + $0x98] sm:$0xff]
    %v47 = vld [vmem:[#allocation2 + $0xa0] sm:$0xff]
    %v48 = vld [vmem:[#allocation2 + $0xa8] sm:$0xff]
    %v49 = vld [vmem:[#allocation2 + $0xb0] sm:$0xff]
    %v50 = vld [vmem:[#allocation2 + $0xb8] sm:$0xff]
    %v51 = vld [vmem:[#allocation2 + $0xc0] sm:$0xff]
    %v52 = vld [vmem:[#allocation2 + $0xc8] sm:$0xff]
    %v53 = vld [vmem:[#allocation2 + $0xd0] sm:$0xff]
    %v54 = vld [vmem:[#allocation2 + $0xd8] sm:$0xff]
    %v55 = vld [vmem:[#allocation2 + $0xe0] sm:$0xff]
    %v56 = vld [vmem:[#allocation2 + $0xe8] sm:$0xff]
    %v57 = vld [vmem:[#allocation2 + $0xf0] sm:$0xff]
    %v58 = vld [vmem:[#allocation2 + $0xf8] sm:$0xff]
    %v59 = vld [vmem:[#allocation2 + $0x100] sm:$0x1]
    %v60 = vlaneseq
    %v61 = vshrl.u32 %v60, 7
    %v62 = vsub.s32 0, %v61
    %v63 = vrot.slane %v59, %v62
    %v66 = vunpack.c.l.s4 1983009808
    %v67 = vunpack.c.0.s8 %v66
    %v68 = vlaneseq
    %v69 = vshrl.u32 %v68, 7
    %v70 = vsub.s32 %v67, %v69
    %v71 = vrot.slane %v25, %v70
    %v72 = vcombine.high %v71, %v71
    %75 = vmatprep.subr.mxu0 0.0
    %76 = vmatpush1.msra.mxu0 %v42
    %77 = vmatprep.subr.mxu0 0.0
    %78 = vmatpush1.msra.mxu0 %v41
    %79 = vmatprep.subr.mxu0 0.0
    %80 = vmatpush1.msra.mxu0 %v40
    %81 = vmatprep.subr.mxu0 0.0
    %82 = vmatpush1.msra.mxu0 %v39
    %83 = vmatprep.subr.mxu0 0.0
    %84 = vmatpush1.msra.mxu0 %v38
    %85 = vmatprep.subr.mxu0 0.0
    %86 = vmatpush1.msra.mxu0 %v37
    %87 = vmatprep.subr.mxu0 0.0
    %88 = vmatpush1.msra.mxu0 %v36
    %89 = vmatprep.subr.mxu0 0.0
    %90 = vmatpush1.msra.mxu0 %v35
    %91 = vmatprep.subr.mxu0 0.0
    %92 = vmatpush1.msra.mxu0 %v34
    %93 = vmatprep.subr.mxu0 0.0
    %94 = vmatpush1.msra.mxu0 %v33
    %95 = vmatprep.subr.mxu0 0.0
    %96 = vmatpush1.msra.mxu0 %v32
    %97 = vmatprep.subr.mxu0 0.0
    %98 = vmatpush1.msra.mxu0 %v31
    %99 = vmatprep.subr.mxu0 0.0
    %100 = vmatpush1.msra.mxu0 %v30
    %101 = vmatprep.subr.mxu0 0.0
    %102 = vmatpush1.msra.mxu0 %v29
    %103 = vmatprep.subr.mxu0 0.0
    %104 = vmatpush1.msra.mxu0 %v28
    %105 = vmatprep.subr.mxu0 0.0
    %106 = vmatpush1.msra.mxu0 %v27
    %107 = vmatprep.subr.mxu0 0.0
    %108 = vmatpush2.msra.mxu0 %v58
    %109 = vmatprep.subr.mxu0 0.0
    %110 = vmatpush2.msra.mxu0 %v57
    %111 = vmatprep.subr.mxu0 0.0
    %112 = vmatpush2.msra.mxu0 %v56
    %113 = vmatprep.subr.mxu0 0.0
    %114 = vmatpush2.msra.mxu0 %v55
    %115 = vmatprep.subr.mxu0 0.0
    %116 = vmatpush2.msra.mxu0 %v54
    %117 = vmatprep.subr.mxu0 0.0
    %118 = vmatpush2.msra.mxu0 %v53
    %119 = vmatprep.subr.mxu0 0.0
    %120 = vmatpush2.msra.mxu0 %v52
    %121 = vmatprep.subr.mxu0 0.0
    %122 = vmatpush2.msra.mxu0 %v51
    %123 = vmatprep.subr.mxu0 0.0
    %124 = vmatpush2.msra.mxu0 %v50
    %125 = vmatprep.subr.mxu0 0.0
    %126 = vmatpush2.msra.mxu0 %v49
    %127 = vmatprep.subr.mxu0 0.0
    %128 = vmatpush2.msra.mxu0 %v48
    %129 = vmatprep.subr.mxu0 0.0
    %130 = vmatpush2.msra.mxu0 %v47
    %131 = vmatprep.subr.mxu0 0.0
    %132 = vmatpush2.msra.mxu0 %v46
    %133 = vmatprep.subr.mxu0 0.0
    %134 = vmatpush2.msra.mxu0 %v45
    %135 = vmatprep.subr.mxu0 0.0
    %136 = vmatpush2.msra.mxu0 %v44
    %137 = vmatprep.subr.mxu0 0.0
    %138 = vmatpush2.msra.mxu0 %v43
    %139 = vmatprep.mubr.f32.mxu0 %v72
    %140 = vmatmul.mubr.f32.gmra.mxu0 %v71
    %v141 = vpop.f32.mrf.mxu0
    %v142 = vadd.f32 %v63, %v141
    %v143 = vpop.f32.mrf.mxu0
    %144 = vdwg.mxu0
    %v145 = vmul.f32 %v142, 1.442695
    %v146 = vpow.pop %v145
    %v149 = vunpack.c.l.s4 1983009808
    %v150 = vunpack.c.0.s8 %v149
    %v151 = vlaneseq
    %v152 = vshrl.u32 %v151, 7
    %v153 = vsub.s32 %v150, %v152
    %v154 = vrot.slane %v146, %v153
    %155 = vrot.lane.b32.xlu0 %v154, 124
    %v156 = vpop.permute.xlu0 %155
    %v158 = vmul.f32 %v26, %v156
    %v159 = vld [vmem:[#allocation2 + $0x101] sm:$0x1]
    %161 = vset.pattern.permute.xlu0 0
    %162 = vperm.xlu0 %161, %v158
    %v163 = vpop.permute.xlu0 %162
    %v166 = vunpack.c.l.s4 269488144
    %v167 = vunpack.c.0.s8 %v166
    %v168 = vlaneseq
    %v169 = vshrl.u32 %v168, 7
    %v170 = vsub.s32 %v167, %v169
    %v171 = vrot.slane %v163, %v170
    %v172 = vlaneseq
    %v173 = vshrl.u32 %v172, 7
    %v174 = vsub.s32 0, %v173
    %v175 = vrot.slane %v159, %v174
    %v176 = vmul.f32 %v171, %v175
    %v177 = vadd.f32 %v142, %v176
    %v178 = vld [vmem:[#allocation2 + $0x102] sm:$0x1]
    %179 = vset.pattern.permute.xlu0 1
    %180 = vperm.xlu0 %179, %v158
    %v181 = vpop.permute.xlu0 %180
    %v184 = vunpack.c.l.s4 269488144
    %v185 = vunpack.c.0.s8 %v184
    %v186 = vlaneseq
    %v187 = vshrl.u32 %v186, 7
    %v188 = vsub.s32 %v185, %v187
    %v189 = vrot.slane %v181, %v188
    %v190 = vlaneseq
    %v191 = vshrl.u32 %v190, 7
    %v192 = vsub.s32 0, %v191
    %v193 = vrot.slane %v178, %v192
    %v194 = vmul.f32 %v189, %v193
    %v195 = vadd.f32 %v177, %v194
    %v196 = vld [vmem:[#allocation2 + $0x103] sm:$0x1]
    %197 = vset.pattern.permute.xlu0 2
    %198 = vperm.xlu0 %197, %v158
    %v199 = vpop.permute.xlu0 %198
    %v202 = vunpack.c.l.s4 269488144
    %v203 = vunpack.c.0.s8 %v202
    %v204 = vlaneseq
    %v205 = vshrl.u32 %v204, 7
    %v206 = vsub.s32 %v203, %v205
    %v207 = vrot.slane %v199, %v206
    %v208 = vlaneseq
    %v209 = vshrl.u32 %v208, 7
    %v210 = vsub.s32 0, %v209
    %v211 = vrot.slane %v196, %v210
    %v212 = vmul.f32 %v207, %v211
    %v213 = vadd.f32 %v195, %v212
    %v214 = vld [vmem:[#allocation2 + $0x104] sm:$0x1]
    %215 = vset.pattern.permute.xlu0 3
    %216 = vperm.xlu0 %215, %v158
    %v217 = vpop.permute.xlu0 %216
    %v220 = vunpack.c.l.s4 269488144
    %v221 = vunpack.c.0.s8 %v220
    %v222 = vlaneseq
    %v223 = vshrl.u32 %v222, 7
    %v224 = vsub.s32 %v221, %v223
    %v225 = vrot.slane %v217, %v224
    %v226 = vlaneseq
    %v227 = vshrl.u32 %v226, 7
    %v228 = vsub.s32 0, %v227
    %v229 = vrot.slane %v214, %v228
    %v230 = vmul.f32 %v225, %v229
    %v231 = vadd.f32 %v213, %v230
    %v232 = vmul.f32 %v142, %v142
    %v233 = vmul.f32 %v146, %v146
    %235 = vrot.lane.b32.xlu0 %v233, 124
    %v236 = vpop.permute.xlu0 %235
    %v238 = vadd.f32 %v232, %v236
    %v239 = vsub.f32 %v238, 1.0
    %v240 = vmul.f32 %v239, 0.5
    %242 = vrot.lane.b32.xlu0 %v142, 124
    %v243 = vpop.permute.xlu0 %242
    %v245 = vsub.f32 %v240, %v243
    %vm246 = vcmask 25600
    %v247 = vsel %vm246, %v245, 0.0
    %248 = vadd.xlane.f32.xlu0 %v247
    %v249 = vpop.xlane.xlu0 %248
    %vm250 = vcmask 1041408
    %v251 = vsel %vm250, %v249, 0.0
    %v252 = vrot.slane %v251, 4
    %v253 = vadd.f32 %v251, %v252
    %v254 = vrot.slane %v253, 2
    %v255 = vadd.f32 %v253, %v254
    %v256 = vrot.slane %v255, 1
    %v257 = vadd.f32 %v255, %v256
    %v258 = vld [vmem:[#allocation2 + $0x105] sm:$0x1]
    %v259 = vmul.f32 %v257, %v258
    %v260 = vlaneseq
    %v261 = vshrl.u32 %v260, 7
    %v262 = vsub.s32 0, %v261
    %v263 = vrot.slane %v259, %v262
    %v264 = vadd.f32 %v231, %v263
    %265 = vst [vmem:[%s2] sm:$0x3] %v264
    // Predicated region
    $region14: #{vae_model_forward.1} parent=1 // pred_check
      _
    $region15: #{vae_model_forward.1} parent=1 // pred_check_branch
      %267 = sbr.rel (0) target = $region17
    $region16: #{vae_model_forward.1} parent=1 // pred_region
      _
    $region17: #{vae_model_forward.1} parent=1 // pred_fallthru
      _
    // Predicated region
    $region18: #{vae_model_forward.1} parent=1 // pred_check
      _
    $region19: #{vae_model_forward.1} parent=1 // pred_check_branch
      %269 = sbr.rel (0) target = $region21
    $region20: #{vae_model_forward.1} parent=1 // pred_region
      _
    $region21: #{vae_model_forward.1} parent=1 // pred_fallthru
      _
    %270 = vsyncpa [#allocation3], 1

</llo_original>
